<compile_context>
chip_gen: v5e
topology: v5e:2x2
jax: 0.10.0
libtpu: 0.0.40
codegen_flags: <defaults>
</compile_context>

<pallas_src>
import functools

import jax
import jax.numpy as jnp
from jax.experimental import pallas as pl
from jax.experimental.pallas import tpu as pltpu


_SQRT_HALF = 0.7071067811865476


def _gelu_exact(z):
    # nn.GELU() default is the exact (erf) formulation.
    return 0.5 * z * (1.0 + jax.lax.erf(z * _SQRT_HALF))


def _gmlp_kernel(x_ref, w1_ref, b1_ref, w2_ref, b2_ref, o_ref, *,
                 hidden_p, batch_block):
    # Grid-invariant weights/biases: load once per grid step (hoisted out of loop).
    w1 = w1_ref[...]            # (2*Hp, C_in)   u rows then z rows
    b1 = b1_ref[...]            # (2*Hp, 1)
    w2 = w2_ref[...]            # (C_out, Hp)
    b2 = b2_ref[...]            # (C_out, 1)
    for b in range(batch_block):                      # static unroll, small
        x = x_ref[b]                                  # (C_in, T), pixels on lanes
        h = jnp.dot(w1, x, preferred_element_type=jnp.float32) + b1   # (2*Hp, T)
        u = h[:hidden_p]                              # 8-aligned sublane slice
        z = h[hidden_p:]
        g = u * _gelu_exact(z)                        # (Hp, T)
        y = jnp.dot(w2, g, preferred_element_type=jnp.float32) + b2   # (C_out, T)
        o_ref[b] = y.astype(o_ref.dtype)              # lane-dense store


def _cdiv(a, b):
    return -(-a // b)


def _round_up(a, b):
    return _cdiv(a, b) * b


def _vmem_capacity_bytes():
    """Per-generation VMEM capacity; conservative fallback if query fails."""
    try:
        info = pltpu.get_tpu_info()
        cap = getattr(info, "vmem_capacity_bytes", None)
        if cap:
            return int(cap)
    except Exception:
        pass
    return 64 << 20    # v7x per-core VMEM (smallest of the three generations)


def _const_spec(shape):
    """BlockSpec for a grid-invariant operand: single-buffered if supported."""
    idx = lambda i, j: (0, 0)
    try:
        return pl.BlockSpec(shape, idx, pipeline_mode=pl.Buffered(1))
    except TypeError:       # older BlockSpec without pipeline_mode kwarg
        return pl.BlockSpec(shape, idx)


def _choose_tiling(batch, c_in, c_out, hidden_p, hw, vmem_cap):
    """Return (batch_block, lane_tile, hw_pad)."""
    # Group several images per grid step only when channels underfill sublanes.
    bb = 1
    if max(c_in, c_out) < 8:
        bb = min(batch, max(1, 8 // max(c_in, c_out, 1)))
        while bb > 1 and batch % bb:
            bb -= 1

    # VMEM budget -> max affordable lane tile.  Weights single-buffered;
    # x/out slabs double-buffered; h/g/y intermediates live once per image.
    budget = int(0.70 * vmem_cap)
    weight_bytes = 4 * (2 * hidden_p * c_in + 2 * hidden_p
                        + c_out * hidden_p + c_out)
    per_lane = 4 * (2 * bb * (c_in + c_out)      # double-buffered x / out slabs
                    + bb * c_in                  # x tile in vregs
                    + 3 * hidden_p + c_out)      # h, g, y intermediates
    max_tile = max(128, (budget - weight_bytes) // per_lane)

    hw128 = _round_up(hw, 128)
    cap = max(128, min(max_tile // 128 * 128, 4096, hw128))
    cands = list(range(128, cap + 1, 128))
    n_batch_steps = batch // bb
    waste_ok = max(hw // 8, 127)                 # <=12.5% padded lanes (or 1 row)

    def padded(t):
        return _cdiv(hw, t) * t

    def steps(t):
        return n_batch_steps * _cdiv(hw, t)

    tile = None
    # 1) biggest low-waste tile that keeps >= 8 total grid steps
    #    (software pipelining + both v7x TensorCores busy).
    for t in reversed(cands):
        if padded(t) - hw <= waste_ok and steps(t) >= 8:
            tile = t
            break
    # 2) tiny problems: biggest low-waste tile regardless of step count.
    if tile is None:
        for t in reversed(cands):
            if padded(t) - hw <= waste_ok:
                tile = t
                break
    # 3) otherwise minimize total padded lanes, preferring the larger tile.
    if tile is None:
        tile = min(cands, key=lambda t: (padded(t), -t))
    return bb, tile, padded(tile)


def gmlp_forward_nchw(x_nchw, params):
    """gMlp forward for channels_first=True.  x_nchw: (B, C_in, H, W)."""
    b, c_in, h, w = x_nchw.shape
    w1, b1, w2, b2 = params["w1"], params["b1"], params["w2"], params["b2"]
    hidden = w1.shape[0] // 2
    c_out = w2.shape[0]
    hp = _round_up(hidden, 8)            # 8-aligned sublane split point

    # Pack fc1 as (u rows | z rows), each half zero-padded to hp rows, so the
    # kernel does one merged matmul and splits at an 8-aligned row.  fc2 gets
    # matching zero columns (padded hidden channels contribute nothing).
    w1_u, w1_z = w1[:hidden], w1[hidden:]
    b1_u, b1_z = b1[:hidden], b1[hidden:]
    w2_p = w2
    if hp != hidden:
        rp = hp - hidden
        w1_u = jnp.pad(w1_u, ((0, rp), (0, 0)))
        w1_z = jnp.pad(w1_z, ((0, rp), (0, 0)))
        b1_u = jnp.pad(b1_u, (0, rp))
        b1_z = jnp.pad(b1_z, (0, rp))
        w2_p = jnp.pad(w2, ((0, 0), (0, rp)))
    w1_p = jnp.concatenate([w1_u, w1_z], axis=0)                 # (2*hp, c_in)
    b1_p = jnp.concatenate([b1_u, b1_z]).reshape(2 * hp, 1)
    b2_c = b2.reshape(c_out, 1)

    hw = h * w
    vmem_cap = _vmem_capacity_bytes()
    bb, tile, hw_pad = _choose_tiling(b, c_in, c_out, hp, hw, vmem_cap)

    x3 = x_nchw.reshape(b, c_in, hw)               # free reshape, no transpose
    if hw_pad != hw:
        x3 = jnp.pad(x3, ((0, 0), (0, 0), (0, hw_pad - hw)))

    grid = (b // bb, hw_pad // tile)

    weight_bytes = 4 * (2 * hp * c_in + 2 * hp + c_out * hp + c_out)
    cost = pl.CostEstimate(
        flops=int(2 * b * hw_pad * hp * (2 * c_in + c_out) + 4 * b * hw_pad * hp),
        transcendentals=int(b * hw_pad * hp),
        bytes_accessed=int(4 * b * hw_pad * (c_in + c_out) + weight_bytes),
    )
    # Per-generation scoped-VMEM ceiling; the working set was already sized to
    # ~70% of capacity above, so this never clamps below what the kernel needs.
    vmem_limit = int(max(32 << 20, min(int(0.90 * vmem_cap), 100 << 20)))

    kernel = functools.partial(_gmlp_kernel, hidden_p=hp, batch_block=bb)

    y3 = pl.pallas_call(
        kernel,
        out_shape=jax.ShapeDtypeStruct((b, c_out, hw_pad), x_nchw.dtype),
        grid_spec=pltpu.PrefetchScalarGridSpec(
            num_scalar_prefetch=0,
            grid=grid,
            in_specs=[
                pl.BlockSpec((bb, c_in, tile), lambda i, j: (i, 0, j)),  # x slab
                _const_spec((2 * hp, c_in)),                             # fc1 W
                _const_spec((2 * hp, 1)),                                # fc1 b
                _const_spec((c_out, hp)),                                # fc2 W
                _const_spec((c_out, 1)),                                 # fc2 b
            ],
            out_specs=pl.BlockSpec((bb, c_out, tile), lambda i, j: (i, 0, j)),
        ),
        compiler_params=pltpu.CompilerParams(
            dimension_semantics=("parallel", "parallel"),
            vmem_limit_bytes=vmem_limit),
        cost_estimate=cost,
    )(x3, w1_p, b1_p, w2_p, b2_c)

    if hw_pad != hw:
        y3 = y3[:, :, :hw]
    return y3.reshape(b, c_out, h, w)


def init_params(key, in_features, hidden_features, out_features):
    k1, k2, k3, k4 = jax.random.split(key, 4)
    scale1 = 1.0 / jnp.sqrt(in_features)
    scale2 = 1.0 / jnp.sqrt(hidden_features)
    return {
        # PyTorch nn.Linear weight layout: (out_features, in_features)
        "w1": jax.random.uniform(k1, (2 * hidden_features, in_features),
                                 jnp.float32, -scale1, scale1),
        "b1": jax.random.uniform(k2, (2 * hidden_features,),
                                 jnp.float32, -scale1, scale1),
        "w2": jax.random.uniform(k3, (out_features, hidden_features),
                                 jnp.float32, -scale2, scale2),
        "b2": jax.random.uniform(k4, (out_features,),
                                 jnp.float32, -scale2, scale2),
    }


if __name__ == "__main__":
    key = jax.random.PRNGKey(0)
    kx, kp = jax.random.split(key)

    B, C_IN, H, W = 2, 4, 16, 16          # NCHW
    HIDDEN, C_OUT = 32, 4                 # hidden_features=32, out_features=in_features

    x = jax.random.normal(kx, (B, C_IN, H, W), jnp.float32)
    params = init_params(kp, C_IN, HIDDEN, C_OUT)

    y = jax.jit(gmlp_forward_nchw)(x, params)
    jax.block_until_ready(y)

    # Reference check in plain JAX (same math as the PyTorch module).
    w1, b1, w2, b2 = params["w1"], params["b1"], params["w2"], params["b2"]
    x_rows = jnp.transpose(x, (0, 2, 3, 1)).reshape(-1, C_IN)
    h_ref = x_rows @ w1.T + b1
    u_ref, z_ref = h_ref[:, :HIDDEN], h_ref[:, HIDDEN:]
    g_ref = 0.5 * z_ref * (1.0 + jax.lax.erf(z_ref / jnp.sqrt(2.0)))
    y_ref_rows = (u_ref * g_ref) @ w2.T + b2
    y_ref = jnp.transpose(y_ref_rows.reshape(B, H, W, C_OUT), (0, 3, 1, 2))
    assert jnp.allclose(y, y_ref, atol=1e-4, rtol=1e-4), "mismatch vs reference"

    print("KERNEL_OK")
</pallas_src>

<mosaic_0001>
module attributes {stable_mosaic.version = 11 : i64} {
  func.func @_gmlp_kernel(%arg0: i32, %arg1: i32, %arg2: memref<2x4x256xf32, #tpu.memory_space<vmem>>, %arg3: memref<64x4xf32, #tpu.memory_space<vmem>>, %arg4: memref<64x1xf32, #tpu.memory_space<vmem>>, %arg5: memref<4x32xf32, #tpu.memory_space<vmem>>, %arg6: memref<4x1xf32, #tpu.memory_space<vmem>>, %arg7: memref<2x4x256xf32, #tpu.memory_space<vmem>>) attributes {dimension_semantics = [#tpu.dimension_semantics<parallel>, #tpu.dimension_semantics<parallel>], iteration_bounds = array<i64: 1, 1>, scalar_prefetch = 0 : i64, scratch_operands = 0 : i64, tpu.core_type = #tpu.core_type<tc>, window_params = [{transform_indices = @transform_0, window_bounds = array<i64: 2, 4, 256>}, {pipeline_mode = #tpu.pipeline_mode<synchronous>, transform_indices = @transform_1, window_bounds = array<i64: 64, 4>}, {pipeline_mode = #tpu.pipeline_mode<synchronous>, transform_indices = @transform_2, window_bounds = array<i64: 64, 1>}, {pipeline_mode = #tpu.pipeline_mode<synchronous>, transform_indices = @transform_3, window_bounds = array<i64: 4, 32>}, {pipeline_mode = #tpu.pipeline_mode<synchronous>, transform_indices = @transform_4, window_bounds = array<i64: 4, 1>}, {transform_indices = @transform_5, window_bounds = array<i64: 2, 4, 256>}]} {
    %c0 = arith.constant 0 : index
    %c0_0 = arith.constant 0 : index
    %0 = vector.load %arg3[%c0, %c0_0] : memref<64x4xf32, #tpu.memory_space<vmem>>, vector<64x4xf32>
    %c0_1 = arith.constant 0 : index
    %c0_2 = arith.constant 0 : index
    %1 = vector.load %arg4[%c0_1, %c0_2] : memref<64x1xf32, #tpu.memory_space<vmem>>, vector<64x1xf32>
    %c0_3 = arith.constant 0 : index
    %c0_4 = arith.constant 0 : index
    %2 = vector.load %arg5[%c0_3, %c0_4] : memref<4x32xf32, #tpu.memory_space<vmem>>, vector<4x32xf32>
    %c0_5 = arith.constant 0 : index
    %c0_6 = arith.constant 0 : index
    %3 = vector.load %arg6[%c0_5, %c0_6] : memref<4x1xf32, #tpu.memory_space<vmem>>, vector<4x1xf32>
    %c0_7 = arith.constant 0 : index
    %c0_8 = arith.constant 0 : index
    %c0_9 = arith.constant 0 : index
    %4 = vector.load %arg2[%c0_7, %c0_8, %c0_9] : memref<2x4x256xf32, #tpu.memory_space<vmem>>, vector<1x4x256xf32>
    %5 = vector.shape_cast %4 : vector<1x4x256xf32> to vector<4x256xf32>
    %cst = arith.constant dense<0.000000e+00> : vector<64x256xf32>
    %6 = tpu.matmul %0, %5, %cst {dimension_numbers = #tpu.dot_dimension_numbers<[1], [0], [0], [1], [0, 0, 1, 1], [], []>} : vector<64x4xf32>, vector<4x256xf32>, vector<64x256xf32> -> vector<64x256xf32>
    %7 = vector.broadcast %1 : vector<64x1xf32> to vector<64x256xf32>
    %8 = arith.addf %6, %7 : vector<64x256xf32>
    %9 = vector.extract_strided_slice %8 {offsets = [0, 0], sizes = [32, 256], strides = [1, 1]} : vector<64x256xf32> to vector<32x256xf32>
    %10 = vector.extract_strided_slice %8 {offsets = [32, 0], sizes = [32, 256], strides = [1, 1]} : vector<64x256xf32> to vector<32x256xf32>
    %cst_10 = arith.constant 5.000000e-01 : f32
    %11 = vector.broadcast %cst_10 : f32 to vector<32x256xf32>
    %12 = arith.mulf %11, %10 : vector<32x256xf32>
    %cst_11 = arith.constant 0.707106769 : f32
    %13 = vector.broadcast %cst_11 : f32 to vector<32x256xf32>
    %14 = arith.mulf %10, %13 : vector<32x256xf32>
    %15 = math.erf %14 : vector<32x256xf32>
    %cst_12 = arith.constant 1.000000e+00 : f32
    %16 = vector.broadcast %cst_12 : f32 to vector<32x256xf32>
    %17 = arith.addf %16, %15 : vector<32x256xf32>
    %18 = arith.mulf %12, %17 : vector<32x256xf32>
    %19 = arith.mulf %9, %18 : vector<32x256xf32>
    %cst_13 = arith.constant dense<0.000000e+00> : vector<4x256xf32>
    %20 = tpu.matmul %2, %19, %cst_13 {dimension_numbers = #tpu.dot_dimension_numbers<[1], [0], [0], [1], [0, 0, 1, 1], [], []>} : vector<4x32xf32>, vector<32x256xf32>, vector<4x256xf32> -> vector<4x256xf32>
    %21 = vector.broadcast %3 : vector<4x1xf32> to vector<4x256xf32>
    %22 = arith.addf %20, %21 : vector<4x256xf32>
    %c0_14 = arith.constant 0 : index
    %c0_15 = arith.constant 0 : index
    %c0_16 = arith.constant 0 : index
    %23 = vector.load %arg7[%c0_14, %c0_15, %c0_16] : memref<2x4x256xf32, #tpu.memory_space<vmem>>, vector<1x4x256xf32>
    %24 = vector.shape_cast %23 : vector<1x4x256xf32> to vector<4x256xf32>
    %25 = vector.shape_cast %22 : vector<4x256xf32> to vector<1x4x256xf32>
    tpu.vector_store %arg7[%c0_14, %c0_15, %c0_16], %25 {strides = array<i32>} : memref<2x4x256xf32, #tpu.memory_space<vmem>>, vector<1x4x256xf32>,
    %c1 = arith.constant 1 : index
    %c0_17 = arith.constant 0 : index
    %c0_18 = arith.constant 0 : index
    %26 = vector.load %arg2[%c1, %c0_17, %c0_18] : memref<2x4x256xf32, #tpu.memory_space<vmem>>, vector<1x4x256xf32>
    %27 = vector.shape_cast %26 : vector<1x4x256xf32> to vector<4x256xf32>
    %cst_19 = arith.constant dense<0.000000e+00> : vector<64x256xf32>
    %28 = tpu.matmul %0, %27, %cst_19 {dimension_numbers = #tpu.dot_dimension_numbers<[1], [0], [0], [1], [0, 0, 1, 1], [], []>} : vector<64x4xf32>, vector<4x256xf32>, vector<64x256xf32> -> vector<64x256xf32>
    %29 = vector.broadcast %1 : vector<64x1xf32> to vector<64x256xf32>
    %30 = arith.addf %28, %29 : vector<64x256xf32>
    %31 = vector.extract_strided_slice %30 {offsets = [0, 0], sizes = [32, 256], strides = [1, 1]} : vector<64x256xf32> to vector<32x256xf32>
    %32 = vector.extract_strided_slice %30 {offsets = [32, 0], sizes = [32, 256], strides = [1, 1]} : vector<64x256xf32> to vector<32x256xf32>
    %cst_20 = arith.constant 5.000000e-01 : f32
    %33 = vector.broadcast %cst_20 : f32 to vector<32x256xf32>
    %34 = arith.mulf %33, %32 : vector<32x256xf32>
    %cst_21 = arith.constant 0.707106769 : f32
    %35 = vector.broadcast %cst_21 : f32 to vector<32x256xf32>
    %36 = arith.mulf %32, %35 : vector<32x256xf32>
    %37 = math.erf %36 : vector<32x256xf32>
    %cst_22 = arith.constant 1.000000e+00 : f32
    %38 = vector.broadcast %cst_22 : f32 to vector<32x256xf32>
    %39 = arith.addf %38, %37 : vector<32x256xf32>
    %40 = arith.mulf %34, %39 : vector<32x256xf32>
    %41 = arith.mulf %31, %40 : vector<32x256xf32>
    %cst_23 = arith.constant dense<0.000000e+00> : vector<4x256xf32>
    %42 = tpu.matmul %2, %41, %cst_23 {dimension_numbers = #tpu.dot_dimension_numbers<[1], [0], [0], [1], [0, 0, 1, 1], [], []>} : vector<4x32xf32>, vector<32x256xf32>, vector<4x256xf32> -> vector<4x256xf32>
    %43 = vector.broadcast %3 : vector<4x1xf32> to vector<4x256xf32>
    %44 = arith.addf %42, %43 : vector<4x256xf32>
    %c1_24 = arith.constant 1 : index
    %c0_25 = arith.constant 0 : index
    %c0_26 = arith.constant 0 : index
    %45 = vector.load %arg7[%c1_24, %c0_25, %c0_26] : memref<2x4x256xf32, #tpu.memory_space<vmem>>, vector<1x4x256xf32>
    %46 = vector.shape_cast %45 : vector<1x4x256xf32> to vector<4x256xf32>
    %47 = vector.shape_cast %44 : vector<4x256xf32> to vector<1x4x256xf32>
    tpu.vector_store %arg7[%c1_24, %c0_25, %c0_26], %47 {strides = array<i32>} : memref<2x4x256xf32, #tpu.memory_space<vmem>>, vector<1x4x256xf32>,
    return
  }
  func.func @transform_0(%arg0: i32, %arg1: i32) -> (i32, i32, i32) {
    %c0_i32 = arith.constant 0 : i32
    %c0_i32_0 = arith.constant 0 : i32
    return %arg0, %c0_i32, %arg1 : i32, i32, i32
  }
  func.func @transform_1(%arg0: i32, %arg1: i32) -> (i32, i32) {
    %c0_i32 = arith.constant 0 : i32
    %c0_i32_0 = arith.constant 0 : i32
    %c0_i32_1 = arith.constant 0 : i32
    return %c0_i32, %c0_i32_0 : i32, i32
  }
  func.func @transform_2(%arg0: i32, %arg1: i32) -> (i32, i32) {
    %c0_i32 = arith.constant 0 : i32
    %c0_i32_0 = arith.constant 0 : i32
    %c0_i32_1 = arith.constant 0 : i32
    return %c0_i32, %c0_i32_0 : i32, i32
  }
  func.func @transform_3(%arg0: i32, %arg1: i32) -> (i32, i32) {
    %c0_i32 = arith.constant 0 : i32
    %c0_i32_0 = arith.constant 0 : i32
    %c0_i32_1 = arith.constant 0 : i32
    return %c0_i32, %c0_i32_0 : i32, i32
  }
  func.func @transform_4(%arg0: i32, %arg1: i32) -> (i32, i32) {
    %c0_i32 = arith.constant 0 : i32
    %c0_i32_0 = arith.constant 0 : i32
    %c0_i32_1 = arith.constant 0 : i32
    return %c0_i32, %c0_i32_0 : i32, i32
  }
  func.func @transform_5(%arg0: i32, %arg1: i32) -> (i32, i32, i32) {
    %c0_i32 = arith.constant 0 : i32
    %c0_i32_0 = arith.constant 0 : i32
    return %arg0, %c0_i32, %arg1 : i32, i32, i32
  }
}

</mosaic_0001>

<llo_original>
// kernel: gmlp_forward_nchw.1
$region0: #{gmlp_forward_nchw.1}
  #allocation0 [shape = 'u32[]', space=smem, size = 0x4, offset = 0x4, fixed_abs, tag = 'smem constant byte address 0x4 - core index']
  #allocation1 [shape = 'u32[72,128]{1,0:T(1,128)}', space=vmem, size = 0x9000, scoped, tag = 'internal scratch']
  %s0 = inlined_call_operand.vmem [shape: f32[2,4,256], index: 0, kind: input, shape index: {}]
  %s1 = inlined_call_operand.vmem [shape: f32[64,4], index: 1, kind: input, shape index: {}]
  %s2 = inlined_call_operand.vmem [shape: f32[64,1], index: 2, kind: input, shape index: {}]
  %s3 = inlined_call_operand.vmem [shape: f32[4,32], index: 3, kind: input, shape index: {}]
  %s4 = inlined_call_operand.vmem [shape: f32[4,1], index: 4, kind: input, shape index: {}]
  %s5 = inlined_call_operand.vmem [shape: f32[2,4,256], index: 5, kind: output, shape index: {}]
  %s6 = sld [smem:[#allocation0]]
  $region30: #{gmlp_forward_nchw.1} parent=0
    _
  %s8 = ssub.s32 1, %s6
  %s9 = scalar_select 0, %s8, %s6
  // Predicated region
  $region2: #{gmlp_forward_nchw.1} parent=0 // pred_check
    _
  $region3: #{gmlp_forward_nchw.1} parent=0 // pred_check_branch
    %11 = sbr.rel (0) target = $region5
  $region4: #{gmlp_forward_nchw.1} parent=0 // pred_region
    _
  $region5: #{gmlp_forward_nchw.1} parent=0 // pred_fallthru
    _
  // Predicated region
  $region6: #{gmlp_forward_nchw.1} parent=0 // pred_check
    _
  $region7: #{gmlp_forward_nchw.1} parent=0 // pred_check_branch
    %13 = sbr.rel (0) target = $region9
  $region8: #{gmlp_forward_nchw.1} parent=0 // pred_region
    _
  $region9: #{gmlp_forward_nchw.1} parent=0 // pred_fallthru
    _
  // Predicated region
  $region10: #{gmlp_forward_nchw.1} parent=0 // pred_check
    _
  $region11: #{gmlp_forward_nchw.1} parent=0 // pred_check_branch
    %15 = sbr.rel (0) target = $region13
  $region12: #{gmlp_forward_nchw.1} parent=0 // pred_region
    _
  $region13: #{gmlp_forward_nchw.1} parent=0 // pred_fallthru
    _
  // Predicated region
  $region14: #{gmlp_forward_nchw.1} parent=0 // pred_check
    _
  $region15: #{gmlp_forward_nchw.1} parent=0 // pred_check_branch
    %17 = sbr.rel (0) target = $region17
  $region16: #{gmlp_forward_nchw.1} parent=0 // pred_region
    _
  $region17: #{gmlp_forward_nchw.1} parent=0 // pred_fallthru
    _
  // Predicated region
  $region18: #{gmlp_forward_nchw.1} parent=0 // pred_check
    _
  $region19: #{gmlp_forward_nchw.1} parent=0 // pred_check_branch
    %19 = sbr.rel (0) target = $region21
  $region20: #{gmlp_forward_nchw.1} parent=0 // pred_region
    _
  $region21: #{gmlp_forward_nchw.1} parent=0 // pred_fallthru
    _
  %v20 = vld [vmem:[%s1] sm:$0xff]
  %v21 = vld [vmem:[%s1 + $0x8] sm:$0xff]
  %v22 = vld [vmem:[%s1 + $0x10] sm:$0xff]
  %v23 = vld [vmem:[%s1 + $0x18] sm:$0xff]
  %v24 = vld [vmem:[%s1 + $0x20] sm:$0xff]
  %v25 = vld [vmem:[%s1 + $0x28] sm:$0xff]
  %v26 = vld [vmem:[%s1 + $0x30] sm:$0xff]
  %v27 = vld [vmem:[%s1 + $0x38] sm:$0xff]
  %v28 = vld [vmem:[%s2] sm:$0xff]
  %v29 = vld [vmem:[%s2 + $0x8] sm:$0xff]
  %v30 = vld [vmem:[%s2 + $0x10] sm:$0xff]
  %v31 = vld [vmem:[%s2 + $0x18] sm:$0xff]
  %v32 = vld [vmem:[%s2 + $0x20] sm:$0xff]
  %v33 = vld [vmem:[%s2 + $0x28] sm:$0xff]
  %v34 = vld [vmem:[%s2 + $0x30] sm:$0xff]
  %v35 = vld [vmem:[%s2 + $0x38] sm:$0xff]
  %v36 = vld [vmem:[%s3] sm:$0xf]
  %v37 = vld [vmem:[%s4] sm:$0xf]
  %v38 = vld [vmem:[%s0] sm:$0xff]
  %40 = vset.pattern.permute.xlu0 0
  %41 = vperm.xlu0 %40, %v28
  %v42 = vpop.permute.xlu0 %41
  %45 = vset.pattern.permute.xlu0 0
  %46 = vperm.xlu0 %45, %v29
  %v47 = vpop.permute.xlu0 %46
  %50 = vset.pattern.permute.xlu0 0
  %51 = vperm.xlu0 %50, %v30
  %v52 = vpop.permute.xlu0 %51
  %55 = vset.pattern.permute.xlu0 0
  %56 = vperm.xlu0 %55, %v31
  %v57 = vpop.permute.xlu0 %56
  %60 = vset.pattern.permute.xlu0 0
  %61 = vperm.xlu0 %60, %v32
  %v62 = vpop.permute.xlu0 %61
  %65 = vset.pattern.permute.xlu0 0
  %66 = vperm.xlu0 %65, %v33
  %v67 = vpop.permute.xlu0 %66
  %70 = vset.pattern.permute.xlu0 0
  %71 = vperm.xlu0 %70, %v34
  %v72 = vpop.permute.xlu0 %71
  %75 = vset.pattern.permute.xlu0 0
  %76 = vperm.xlu0 %75, %v35
  %v77 = vpop.permute.xlu0 %76
  %80 = vst [vmem:[#allocation1] ss:$2 sm:$0xff] %v38
  %v81 = vld.sshfl [vmem:[#allocation1] sm:$0xff pattern:$0x75316420]
  %v82 = vld.sshfl [vmem:[#allocation1 + $0x8] sm:$0xff pattern:$0x75316420]
  %vm83 = vcmask 31744
  %v85 = vsel %vm83, %v20, 0
  %v88 = vsel %vm83, %v21, 0
  %v91 = vsel %vm83, %v22, 0
  %v94 = vsel %vm83, %v23, 0
  %v97 = vsel %vm83, %v24, 0
  %v100 = vsel %vm83, %v25, 0
  %v103 = vsel %vm83, %v26, 0
  %v106 = vsel %vm83, %v27, 0
  %vm108 = vcmask 1043456
  %v109 = vsel %vm108, %v81, 0
  %v111 = vsel %vm108, %v82, 0
  %113 = vmatpush.msra.mxu0 0.0
  %114 = vmatpush.msra.mxu0 0.0
  %115 = vmatpush.msra.mxu0 0.0
  %116 = vmatpush.msra.mxu0 0.0
  %117 = vmatpush.msra.mxu0 0.0
  %118 = vmatpush.msra.mxu0 0.0
  %119 = vmatpush.msra.mxu0 0.0
  %120 = vmatpush.msra.mxu0 0.0
  %121 = vmatpush.msra.mxu0 0.0
  %122 = vmatpush.msra.mxu0 0.0
  %123 = vmatpush.msra.mxu0 0.0
  %124 = vmatpush.msra.mxu0 0.0
  %125 = vmatpush.msra.mxu0 0.0
  %126 = vmatpush.msra.mxu0 0.0
  %127 = vmatpush.msra.mxu0 0.0
  %128 = vmatpush.msra.mxu0 %v109
  %129 = vmatmul.f32.gmra.mxu0 %v85
  %v130 = vpop.f32.mrf.mxu0
  %v131 = vadd.f32 %v42, %v130
  %132 = vmatmul.f32.gmra.mxu0 %v88
  %v133 = vpop.f32.mrf.mxu0
  %v134 = vadd.f32 %v47, %v133
  %135 = vmatmul.f32.gmra.mxu0 %v91
  %v136 = vpop.f32.mrf.mxu0
  %v137 = vadd.f32 %v52, %v136
  %138 = vmatmul.f32.gmra.mxu0 %v94
  %v139 = vpop.f32.mrf.mxu0
  %v140 = vadd.f32 %v57, %v139
  %141 = vmatmul.f32.gmra.mxu0 %v97
  %v142 = vpop.f32.mrf.mxu0
  %v143 = vadd.f32 %v62, %v142
  %144 = vmatmul.f32.gmra.mxu0 %v100
  %v145 = vpop.f32.mrf.mxu0
  %v146 = vadd.f32 %v67, %v145
  %147 = vmatmul.f32.gmra.mxu0 %v103
  %v148 = vpop.f32.mrf.mxu0
  %v149 = vadd.f32 %v72, %v148
  %150 = vmatmul.f32.gmra.mxu0 %v106
  %v151 = vpop.f32.mrf.mxu0
  %v152 = vadd.f32 %v77, %v151
  %153 = vdwg.mxu0
  %154 = vmatpush.msra.mxu0 0.0
  %155 = vmatpush.msra.mxu0 0.0
  %156 = vmatpush.msra.mxu0 0.0
  %157 = vmatpush.msra.mxu0 0.0
  %158 = vmatpush.msra.mxu0 0.0
  %159 = vmatpush.msra.mxu0 0.0
  %160 = vmatpush.msra.mxu0 0.0
  %161 = vmatpush.msra.mxu0 0.0
  %162 = vmatpush.msra.mxu0 0.0
  %163 = vmatpush.msra.mxu0 0.0
  %164 = vmatpush.msra.mxu0 0.0
  %165 = vmatpush.msra.mxu0 0.0
  %166 = vmatpush.msra.mxu0 0.0
  %167 = vmatpush.msra.mxu0 0.0
  %168 = vmatpush.msra.mxu0 0.0
  %169 = vmatpush.msra.mxu0 %v111
  %170 = vmatmul.f32.gmra.mxu0 %v85
  %v171 = vpop.f32.mrf.mxu0
  %v172 = vadd.f32 %v42, %v171
  %173 = vmatmul.f32.gmra.mxu0 %v88
  %v174 = vpop.f32.mrf.mxu0
  %v175 = vadd.f32 %v47, %v174
  %176 = vmatmul.f32.gmra.mxu0 %v91
  %v177 = vpop.f32.mrf.mxu0
  %v178 = vadd.f32 %v52, %v177
  %179 = vmatmul.f32.gmra.mxu0 %v94
  %v180 = vpop.f32.mrf.mxu0
  %v181 = vadd.f32 %v57, %v180
  %182 = vmatmul.f32.gmra.mxu0 %v97
  %v183 = vpop.f32.mrf.mxu0
  %v184 = vadd.f32 %v62, %v183
  %185 = vmatmul.f32.gmra.mxu0 %v100
  %v186 = vpop.f32.mrf.mxu0
  %v187 = vadd.f32 %v67, %v186
  %188 = vmatmul.f32.gmra.mxu0 %v103
  %v189 = vpop.f32.mrf.mxu0
  %v190 = vadd.f32 %v72, %v189
  %191 = vmatmul.f32.gmra.mxu0 %v106
  %v192 = vpop.f32.mrf.mxu0
  %v193 = vadd.f32 %v77, %v192
  %194 = vdwg.mxu0
  %v195 = vmul.f32 %v143, 0.5
  %v196 = vmul.f32 %v184, 0.5
  %v197 = vmul.f32 %v146, 0.5
  %v198 = vmul.f32 %v187, 0.5
  %v199 = vmul.f32 %v149, 0.5
  %v200 = vmul.f32 %v190, 0.5
  %v201 = vmul.f32 %v152, 0.5
  %v202 = vmul.f32 %v193, 0.5
  %v203 = vmul.f32 %v143, 0.70710677
  %v204 = vmul.f32 %v184, 0.70710677
  %v205 = vmul.f32 %v146, 0.70710677
  %v206 = vmul.f32 %v187, 0.70710677
  %v207 = vmul.f32 %v149, 0.70710677
  %v208 = vmul.f32 %v190, 0.70710677
  %v209 = vmul.f32 %v152, 0.70710677
  %v210 = vmul.f32 %v193, 0.70710677
  %v211 = vmul.f32 %v203, %v203
  %v212 = vmin.f32 16.0, %v211
  %v213 = vmul.f32 %v212, 2.1237322e-06
  %v214 = vadd.f32 %v213, 0.00028619796
  %v215 = vmul.f32 %v212, %v214
  %v216 = vadd.f32 %v215, 0.0036580483
  %v217 = vmul.f32 %v212, %v216
  %v218 = vadd.f32 %v217, 0.05243302
  %v219 = vmul.f32 %v212, %v218
  %v220 = vadd.f32 %v219, 0.18741608
  %v221 = vmul.f32 %v212, %v220
  %v222 = vadd.f32 %v221, 1.1283791
  %v223 = vmul.f32 %v203, %v222
  %v224 = vmul.f32 %v212, 3.8918573e-05
  %v225 = vadd.f32 %v224, 0.001143296
  %v226 = vmul.f32 %v212, %v225
  %v227 = vadd.f32 %v226, 0.014752088
  %v228 = vmul.f32 %v212, %v227
  %v229 = vadd.f32 %v228, 0.112945676
  %v230 = vmul.f32 %v212, %v229
  %v231 = vadd.f32 %v230, 0.4994258
  %v232 = vmul.f32 %v212, %v231
  %v233 = vadd.f32 %v232, 1.0
  %v234 = vrcp.pop %v233
  %v235 = vmul.f32 %v233, %v234
  %v236 = vsub.f32 1.0, %v235
  %v237 = vmul.f32 %v234, %v236
  %v238 = vadd.f32 %v234, %v237
  %vm239 = vweird.f32 %v233
  %vm240 = vweird.f32 %v234
  %vm241 = vmor %vm239, %vm240
  %v242 = vsel %vm241, %v234, %v238
  %v243 = vand.u32 2147483647, %v233
  %vm244 = vcmp.eq.f32.partialorder %v243, 8.507059e+37
  %v245 = vand.u32 %v233, 2147483648
  %v246 = vor.u32 1.1754944e-38, %v245
  %v247 = vsel %vm244, %v246, %v242
  %v248 = vmul.f32 %v223, %v247
  %v249 = vmin.f32 %v248, 1.0
  %v250 = vmax.f32 %v249, -1.0
  %v251 = vmul.f32 %v204, %v204
  %v252 = vmin.f32 16.0, %v251
  %v253 = vmul.f32 %v252, 2.1237322e-06
  %v254 = vadd.f32 %v253, 0.00028619796
  %v255 = vmul.f32 %v252, %v254
  %v256 = vadd.f32 %v255, 0.0036580483
  %v257 = vmul.f32 %v252, %v256
  %v258 = vadd.f32 %v257, 0.05243302
  %v259 = vmul.f32 %v252, %v258
  %v260 = vadd.f32 %v259, 0.18741608
  %v261 = vmul.f32 %v252, %v260
  %v262 = vadd.f32 %v261, 1.1283791
  %v263 = vmul.f32 %v204, %v262
  %v264 = vmul.f32 %v252, 3.8918573e-05
  %v265 = vadd.f32 %v264, 0.001143296
  %v266 = vmul.f32 %v252, %v265
  %v267 = vadd.f32 %v266, 0.014752088
  %v268 = vmul.f32 %v252, %v267
  %v269 = vadd.f32 %v268, 0.112945676
  %v270 = vmul.f32 %v252, %v269
  %v271 = vadd.f32 %v270, 0.4994258
  %v272 = vmul.f32 %v252, %v271
  %v273 = vadd.f32 %v272, 1.0
  %v274 = vrcp.pop %v273
  %v275 = vmul.f32 %v273, %v274
  %v276 = vsub.f32 1.0, %v275
  %v277 = vmul.f32 %v274, %v276
  %v278 = vadd.f32 %v274, %v277
  %vm279 = vweird.f32 %v273
  %vm280 = vweird.f32 %v274
  %vm281 = vmor %vm279, %vm280
  %v282 = vsel %vm281, %v274, %v278
  %v283 = vand.u32 2147483647, %v273
  %vm284 = vcmp.eq.f32.partialorder %v283, 8.507059e+37
  %v285 = vand.u32 %v273, 2147483648
  %v286 = vor.u32 1.1754944e-38, %v285
  %v287 = vsel %vm284, %v286, %v282
  %v288 = vmul.f32 %v263, %v287
  %v289 = vmin.f32 %v288, 1.0
  %v290 = vmax.f32 %v289, -1.0
  %v291 = vmul.f32 %v205, %v205
  %v292 = vmin.f32 16.0, %v291
  %v293 = vmul.f32 %v292, 2.1237322e-06
  %v294 = vadd.f32 %v293, 0.00028619796
  %v295 = vmul.f32 %v292, %v294
  %v296 = vadd.f32 %v295, 0.0036580483
  %v297 = vmul.f32 %v292, %v296
  %v298 = vadd.f32 %v297, 0.05243302
  %v299 = vmul.f32 %v292, %v298
  %v300 = vadd.f32 %v299, 0.18741608
  %v301 = vmul.f32 %v292, %v300
  %v302 = vadd.f32 %v301, 1.1283791
  %v303 = vmul.f32 %v205, %v302
  %v304 = vmul.f32 %v292, 3.8918573e-05
  %v305 = vadd.f32 %v304, 0.001143296
  %v306 = vmul.f32 %v292, %v305
  %v307 = vadd.f32 %v306, 0.014752088
  %v308 = vmul.f32 %v292, %v307
  %v309 = vadd.f32 %v308, 0.112945676
  %v310 = vmul.f32 %v292, %v309
  %v311 = vadd.f32 %v310, 0.4994258
  %v312 = vmul.f32 %v292, %v311
  %v313 = vadd.f32 %v312, 1.0
  %v314 = vrcp.pop %v313
  %v315 = vmul.f32 %v313, %v314
  %v316 = vsub.f32 1.0, %v315
  %v317 = vmul.f32 %v314, %v316
  %v318 = vadd.f32 %v314, %v317
  %vm319 = vweird.f32 %v313
  %vm320 = vweird.f32 %v314
  %vm321 = vmor %vm319, %vm320
  %v322 = vsel %vm321, %v314, %v318
  %v323 = vand.u32 2147483647, %v313
  %vm324 = vcmp.eq.f32.partialorder %v323, 8.507059e+37
  %v325 = vand.u32 %v313, 2147483648
  %v326 = vor.u32 1.1754944e-38, %v325
  %v327 = vsel %vm324, %v326, %v322
  %v328 = vmul.f32 %v303, %v327
  %v329 = vmin.f32 %v328, 1.0
  %v330 = vmax.f32 %v329, -1.0
  %v331 = vmul.f32 %v206, %v206
  %v332 = vmin.f32 16.0, %v331
  %v333 = vmul.f32 %v332, 2.1237322e-06
  %v334 = vadd.f32 %v333, 0.00028619796
  %v335 = vmul.f32 %v332, %v334
  %v336 = vadd.f32 %v335, 0.0036580483
  %v337 = vmul.f32 %v332, %v336
  %v338 = vadd.f32 %v337, 0.05243302
  %v339 = vmul.f32 %v332, %v338
  %v340 = vadd.f32 %v339, 0.18741608
  %v341 = vmul.f32 %v332, %v340
  %v342 = vadd.f32 %v341, 1.1283791
  %v343 = vmul.f32 %v206, %v342
  %v344 = vmul.f32 %v332, 3.8918573e-05
  %v345 = vadd.f32 %v344, 0.001143296
  %v346 = vmul.f32 %v332, %v345
  %v347 = vadd.f32 %v346, 0.014752088
  %v348 = vmul.f32 %v332, %v347
  %v349 = vadd.f32 %v348, 0.112945676
  %v350 = vmul.f32 %v332, %v349
  %v351 = vadd.f32 %v350, 0.4994258
  %v352 = vmul.f32 %v332, %v351
  %v353 = vadd.f32 %v352, 1.0
  %v354 = vrcp.pop %v353
  %v355 = vmul.f32 %v353, %v354
  %v356 = vsub.f32 1.0, %v355
  %v357 = vmul.f32 %v354, %v356
  %v358 = vadd.f32 %v354, %v357
  %vm359 = vweird.f32 %v353
  %vm360 = vweird.f32 %v354
  %vm361 = vmor %vm359, %vm360
  %v362 = vsel %vm361, %v354, %v358
  %v363 = vand.u32 2147483647, %v353
  %vm364 = vcmp.eq.f32.partialorder %v363, 8.507059e+37
  %v365 = vand.u32 %v353, 2147483648
  %v366 = vor.u32 1.1754944e-38, %v365
  %v367 = vsel %vm364, %v366, %v362
  %v368 = vmul.f32 %v343, %v367
  %v369 = vmin.f32 %v368, 1.0
  %v370 = vmax.f32 %v369, -1.0
  %v371 = vmul.f32 %v207, %v207
  %v372 = vmin.f32 16.0, %v371
  %v373 = vmul.f32 %v372, 2.1237322e-06
  %v374 = vadd.f32 %v373, 0.00028619796
  %v375 = vmul.f32 %v372, %v374
  %v376 = vadd.f32 %v375, 0.0036580483
  %v377 = vmul.f32 %v372, %v376
  %v378 = vadd.f32 %v377, 0.05243302
  %v379 = vmul.f32 %v372, %v378
  %v380 = vadd.f32 %v379, 0.18741608
  %v381 = vmul.f32 %v372, %v380
  %v382 = vadd.f32 %v381, 1.1283791
  %v383 = vmul.f32 %v207, %v382
  %v384 = vmul.f32 %v372, 3.8918573e-05
  %v385 = vadd.f32 %v384, 0.001143296
  %v386 = vmul.f32 %v372, %v385
  %v387 = vadd.f32 %v386, 0.014752088
  %v388 = vmul.f32 %v372, %v387
  %v389 = vadd.f32 %v388, 0.112945676
  %v390 = vmul.f32 %v372, %v389
  %v391 = vadd.f32 %v390, 0.4994258
  %v392 = vmul.f32 %v372, %v391
  %v393 = vadd.f32 %v392, 1.0
  %v394 = vrcp.pop %v393
  %v395 = vmul.f32 %v393, %v394
  %v396 = vsub.f32 1.0, %v395
  %v397 = vmul.f32 %v394, %v396
  %v398 = vadd.f32 %v394, %v397
  %vm399 = vweird.f32 %v393
  %vm400 = vweird.f32 %v394
  %vm401 = vmor %vm399, %vm400
  %v402 = vsel %vm401, %v394, %v398
  %v403 = vand.u32 2147483647, %v393
  %vm404 = vcmp.eq.f32.partialorder %v403, 8.507059e+37
  %v405 = vand.u32 %v393, 2147483648
  %v406 = vor.u32 1.1754944e-38, %v405
  %v407 = vsel %vm404, %v406, %v402
  %v408 = vmul.f32 %v383, %v407
  %v409 = vmin.f32 %v408, 1.0
  %v410 = vmax.f32 %v409, -1.0
  %v411 = vmul.f32 %v208, %v208
  %v412 = vmin.f32 16.0, %v411
  %v413 = vmul.f32 %v412, 2.1237322e-06
  %v414 = vadd.f32 %v413, 0.00028619796
  %v415 = vmul.f32 %v412, %v414
  %v416 = vadd.f32 %v415, 0.0036580483
  %v417 = vmul.f32 %v412, %v416
  %v418 = vadd.f32 %v417, 0.05243302
  %v419 = vmul.f32 %v412, %v418
  %v420 = vadd.f32 %v419, 0.18741608
  %v421 = vmul.f32 %v412, %v420
  %v422 = vadd.f32 %v421, 1.1283791
  %v423 = vmul.f32 %v208, %v422
  %v424 = vmul.f32 %v412, 3.8918573e-05
  %v425 = vadd.f32 %v424, 0.001143296
  %v426 = vmul.f32 %v412, %v425
  %v427 = vadd.f32 %v426, 0.014752088
  %v428 = vmul.f32 %v412, %v427
  %v429 = vadd.f32 %v428, 0.112945676
  %v430 = vmul.f32 %v412, %v429
  %v431 = vadd.f32 %v430, 0.4994258
  %v432 = vmul.f32 %v412, %v431
  %v433 = vadd.f32 %v432, 1.0
  %v434 = vrcp.pop %v433
  %v435 = vmul.f32 %v433, %v434
  %v436 = vsub.f32 1.0, %v435
  %v437 = vmul.f32 %v434, %v436
  %v438 = vadd.f32 %v434, %v437
  %vm439 = vweird.f32 %v433
  %vm440 = vweird.f32 %v434
  %vm441 = vmor %vm439, %vm440
  %v442 = vsel %vm441, %v434, %v438
  %v443 = vand.u32 2147483647, %v433
  %vm444 = vcmp.eq.f32.partialorder %v443, 8.507059e+37
  %v445 = vand.u32 %v433, 2147483648
  %v446 = vor.u32 1.1754944e-38, %v445
  %v447 = vsel %vm444, %v446, %v442
  %v448 = vmul.f32 %v423, %v447
  %v449 = vmin.f32 %v448, 1.0
  %v450 = vmax.f32 %v449, -1.0
  %v451 = vmul.f32 %v209, %v209
  %v452 = vmin.f32 16.0, %v451
  %v453 = vmul.f32 %v452, 2.1237322e-06
  %v454 = vadd.f32 %v453, 0.00028619796
  %v455 = vmul.f32 %v452, %v454
  %v456 = vadd.f32 %v455, 0.0036580483
  %v457 = vmul.f32 %v452, %v456
  %v458 = vadd.f32 %v457, 0.05243302
  %v459 = vmul.f32 %v452, %v458
  %v460 = vadd.f32 %v459, 0.18741608
  %v461 = vmul.f32 %v452, %v460
  %v462 = vadd.f32 %v461, 1.1283791
  %v463 = vmul.f32 %v209, %v462
  %v464 = vmul.f32 %v452, 3.8918573e-05
  %v465 = vadd.f32 %v464, 0.001143296
  %v466 = vmul.f32 %v452, %v465
  %v467 = vadd.f32 %v466, 0.014752088
  %v468 = vmul.f32 %v452, %v467
  %v469 = vadd.f32 %v468, 0.112945676
  %v470 = vmul.f32 %v452, %v469
  %v471 = vadd.f32 %v470, 0.4994258
  %v472 = vmul.f32 %v452, %v471
  %v473 = vadd.f32 %v472, 1.0
  %v474 = vrcp.pop %v473
  %v475 = vmul.f32 %v473, %v474
  %v476 = vsub.f32 1.0, %v475
  %v477 = vmul.f32 %v474, %v476
  %v478 = vadd.f32 %v474, %v477
  %vm479 = vweird.f32 %v473
  %vm480 = vweird.f32 %v474
  %vm481 = vmor %vm479, %vm480
  %v482 = vsel %vm481, %v474, %v478
  %v483 = vand.u32 2147483647, %v473
  %vm484 = vcmp.eq.f32.partialorder %v483, 8.507059e+37
  %v485 = vand.u32 %v473, 2147483648
  %v486 = vor.u32 1.1754944e-38, %v485
  %v487 = vsel %vm484, %v486, %v482
  %v488 = vmul.f32 %v463, %v487
  %v489 = vmin.f32 %v488, 1.0
  %v490 = vmax.f32 %v489, -1.0
  %v491 = vmul.f32 %v210, %v210
  %v492 = vmin.f32 16.0, %v491
  %v493 = vmul.f32 %v492, 2.1237322e-06
  %v494 = vadd.f32 %v493, 0.00028619796
  %v495 = vmul.f32 %v492, %v494
  %v496 = vadd.f32 %v495, 0.0036580483
  %v497 = vmul.f32 %v492, %v496
  %v498 = vadd.f32 %v497, 0.05243302
  %v499 = vmul.f32 %v492, %v498
  %v500 = vadd.f32 %v499, 0.18741608
  %v501 = vmul.f32 %v492, %v500
  %v502 = vadd.f32 %v501, 1.1283791
  %v503 = vmul.f32 %v210, %v502
  %v504 = vmul.f32 %v492, 3.8918573e-05
  %v505 = vadd.f32 %v504, 0.001143296
  %v506 = vmul.f32 %v492, %v505
  %v507 = vadd.f32 %v506, 0.014752088
  %v508 = vmul.f32 %v492, %v507
  %v509 = vadd.f32 %v508, 0.112945676
  %v510 = vmul.f32 %v492, %v509
  %v511 = vadd.f32 %v510, 0.4994258
  %v512 = vmul.f32 %v492, %v511
  %v513 = vadd.f32 %v512, 1.0
  %v514 = vrcp.pop %v513
  %v515 = vmul.f32 %v513, %v514
  %v516 = vsub.f32 1.0, %v515
  %v517 = vmul.f32 %v514, %v516
  %v518 = vadd.f32 %v514, %v517
  %vm519 = vweird.f32 %v513
  %vm520 = vweird.f32 %v514
  %vm521 = vmor %vm519, %vm520
  %v522 = vsel %vm521, %v514, %v518
  %v523 = vand.u32 2147483647, %v513
  %vm524 = vcmp.eq.f32.partialorder %v523, 8.507059e+37
  %v525 = vand.u32 %v513, 2147483648
  %v526 = vor.u32 1.1754944e-38, %v525
  %v527 = vsel %vm524, %v526, %v522
  %v528 = vmul.f32 %v503, %v527
  %v529 = vmin.f32 %v528, 1.0
  %v530 = vmax.f32 %v529, -1.0
  %v531 = vadd.f32 %v250, 1.0
  %v532 = vadd.f32 %v290, 1.0
  %v533 = vadd.f32 %v330, 1.0
  %v534 = vadd.f32 %v370, 1.0
  %v535 = vadd.f32 %v410, 1.0
  %v536 = vadd.f32 %v450, 1.0
  %v537 = vadd.f32 %v490, 1.0
  %v538 = vadd.f32 %v530, 1.0
  %v539 = vmul.f32 %v195, %v531
  %v540 = vmul.f32 %v196, %v532
  %v541 = vmul.f32 %v197, %v533
  %v542 = vmul.f32 %v198, %v534
  %v543 = vmul.f32 %v199, %v535
  %v544 = vmul.f32 %v200, %v536
  %v545 = vmul.f32 %v201, %v537
  %v546 = vmul.f32 %v202, %v538
  %v547 = vmul.f32 %v131, %v539
  %v548 = vmul.f32 %v172, %v540
  %v549 = vmul.f32 %v134, %v541
  %v550 = vmul.f32 %v175, %v542
  %v551 = vmul.f32 %v137, %v543
  %v552 = vmul.f32 %v178, %v544
  %v553 = vmul.f32 %v140, %v545
  %v554 = vmul.f32 %v181, %v546
  %556 = vset.pattern.permute.xlu0 0
  %557 = vperm.xlu0 %556, %v37
  %v558 = vpop.permute.xlu0 %557
  %vm560 = vcmask 261120
  %v562 = vsel %vm560, %v36, 0
  %564 = vmatpush.msra.mxu0 0.0
  %565 = vmatpush.msra.mxu0 0.0
  %566 = vmatpush.msra.mxu0 0.0
  %567 = vmatpush.msra.mxu0 0.0
  %568 = vmatpush.msra.mxu0 0.0
  %569 = vmatpush.msra.mxu0 0.0
  %570 = vmatpush.msra.mxu0 0.0
  %571 = vmatpush.msra.mxu0 0.0
  %572 = vmatpush.msra.mxu0 0.0
  %573 = vmatpush.msra.mxu0 0.0
  %574 = vmatpush.msra.mxu0 0.0
  %575 = vmatpush.msra.mxu0 0.0
  %576 = vmatpush.msra.mxu0 %v553
  %577 = vmatpush.msra.mxu0 %v551
  %578 = vmatpush.msra.mxu0 %v549
  %579 = vmatpush.msra.mxu0 %v547
  %580 = vmatmul.f32.gmra.mxu0 %v562
  %v581 = vpop.f32.mrf.mxu0
  %v582 = vadd.f32 %v558, %v581
  %583 = vdwg.mxu0
  %584 = vmatpush.msra.mxu0 0.0
  %585 = vmatpush.msra.mxu0 0.0
  %586 = vmatpush.msra.mxu0 0.0
  %587 = vmatpush.msra.mxu0 0.0
  %588 = vmatpush.msra.mxu0 0.0
  %589 = vmatpush.msra.mxu0 0.0
  %590 = vmatpush.msra.mxu0 0.0
  %591 = vmatpush.msra.mxu0 0.0
  %592 = vmatpush.msra.mxu0 0.0
  %593 = vmatpush.msra.mxu0 0.0
  %594 = vmatpush.msra.mxu0 0.0
  %595 = vmatpush.msra.mxu0 0.0
  %596 = vmatpush.msra.mxu0 %v554
  %597 = vmatpush.msra.mxu0 %v552
  %598 = vmatpush.msra.mxu0 %v550
  %599 = vmatpush.msra.mxu0 %v548
  %600 = vmatmul.f32.gmra.mxu0 %v562
  %v601 = vpop.f32.mrf.mxu0
  %v602 = vadd.f32 %v558, %v601
  %603 = vdwg.mxu0
  %v606 = vrot.slane %v602, 4
  %v607 = vsel %vm108, %v582, %v606
  %609 = vst [vmem:[%s5] sm:$0xff] %v607
  %s610 = scalar_lea.vmem %s0, 8
  %v611 = vld [vmem:[%s610] sm:$0xff]
  %613 = vst [vmem:[#allocation1] ss:$2 sm:$0xff] %v611
  %v614 = vld.sshfl [vmem:[#allocation1] sm:$0xff pattern:$0x75316420]
  %v615 = vld.sshfl [vmem:[#allocation1 + $0x8] sm:$0xff pattern:$0x75316420]
  %v616 = vsel %vm108, %v614, 0
  %v618 = vsel %vm108, %v615, 0
  %620 = vmatpush.msra.mxu0 0.0
  %621 = vmatpush.msra.mxu0 0.0
  %622 = vmatpush.msra.mxu0 0.0
  %623 = vmatpush.msra.mxu0 0.0
  %624 = vmatpush.msra.mxu0 0.0
  %625 = vmatpush.msra.mxu0 0.0
  %626 = vmatpush.msra.mxu0 0.0
  %627 = vmatpush.msra.mxu0 0.0
  %628 = vmatpush.msra.mxu0 0.0
  %629 = vmatpush.msra.mxu0 0.0
  %630 = vmatpush.msra.mxu0 0.0
  %631 = vmatpush.msra.mxu0 0.0
  %632 = vmatpush.msra.mxu0 0.0
  %633 = vmatpush.msra.mxu0 0.0
  %634 = vmatpush.msra.mxu0 0.0
  %635 = vmatpush.msra.mxu0 %v616
  %636 = vmatmul.f32.gmra.mxu0 %v85
  %v637 = vpop.f32.mrf.mxu0
  %v638 = vadd.f32 %v42, %v637
  %639 = vmatmul.f32.gmra.mxu0 %v88
  %v640 = vpop.f32.mrf.mxu0
  %v641 = vadd.f32 %v47, %v640
  %642 = vmatmul.f32.gmra.mxu0 %v91
  %v643 = vpop.f32.mrf.mxu0
  %v644 = vadd.f32 %v52, %v643
  %645 = vmatmul.f32.gmra.mxu0 %v94
  %v646 = vpop.f32.mrf.mxu0
  %v647 = vadd.f32 %v57, %v646
  %648 = vmatmul.f32.gmra.mxu0 %v97
  %v649 = vpop.f32.mrf.mxu0
  %v650 = vadd.f32 %v62, %v649
  %651 = vmatmul.f32.gmra.mxu0 %v100
  %v652 = vpop.f32.mrf.mxu0
  %v653 = vadd.f32 %v67, %v652
  %654 = vmatmul.f32.gmra.mxu0 %v103
  %v655 = vpop.f32.mrf.mxu0
  %v656 = vadd.f32 %v72, %v655
  %657 = vmatmul.f32.gmra.mxu0 %v106
  %v658 = vpop.f32.mrf.mxu0
  %v659 = vadd.f32 %v77, %v658
  %660 = vdwg.mxu0
  %661 = vmatpush.msra.mxu0 0.0
  %662 = vmatpush.msra.mxu0 0.0
  %663 = vmatpush.msra.mxu0 0.0
  %664 = vmatpush.msra.mxu0 0.0
  %665 = vmatpush.msra.mxu0 0.0
  %666 = vmatpush.msra.mxu0 0.0
  %667 = vmatpush.msra.mxu0 0.0
  %668 = vmatpush.msra.mxu0 0.0
  %669 = vmatpush.msra.mxu0 0.0
  %670 = vmatpush.msra.mxu0 0.0
  %671 = vmatpush.msra.mxu0 0.0
  %672 = vmatpush.msra.mxu0 0.0
  %673 = vmatpush.msra.mxu0 0.0
  %674 = vmatpush.msra.mxu0 0.0
  %675 = vmatpush.msra.mxu0 0.0
  %676 = vmatpush.msra.mxu0 %v618
  %677 = vmatmul.f32.gmra.mxu0 %v85
  %v678 = vpop.f32.mrf.mxu0
  %v679 = vadd.f32 %v42, %v678
  %680 = vmatmul.f32.gmra.mxu0 %v88
  %v681 = vpop.f32.mrf.mxu0
  %v682 = vadd.f32 %v47, %v681
  %683 = vmatmul.f32.gmra.mxu0 %v91
  %v684 = vpop.f32.mrf.mxu0
  %v685 = vadd.f32 %v52, %v684
  %686 = vmatmul.f32.gmra.mxu0 %v94
  %v687 = vpop.f32.mrf.mxu0
  %v688 = vadd.f32 %v57, %v687
  %689 = vmatmul.f32.gmra.mxu0 %v97
  %v690 = vpop.f32.mrf.mxu0
  %v691 = vadd.f32 %v62, %v690
  %692 = vmatmul.f32.gmra.mxu0 %v100
  %v693 = vpop.f32.mrf.mxu0
  %v694 = vadd.f32 %v67, %v693
  %695 = vmatmul.f32.gmra.mxu0 %v103
  %v696 = vpop.f32.mrf.mxu0
  %v697 = vadd.f32 %v72, %v696
  %698 = vmatmul.f32.gmra.mxu0 %v106
  %v699 = vpop.f32.mrf.mxu0
  %v700 = vadd.f32 %v77, %v699
  %701 = vdwg.mxu0
  %v702 = vmul.f32 %v650, 0.5
  %v703 = vmul.f32 %v691, 0.5
  %v704 = vmul.f32 %v653, 0.5
  %v705 = vmul.f32 %v694, 0.5
  %v706 = vmul.f32 %v656, 0.5
  %v707 = vmul.f32 %v697, 0.5
  %v708 = vmul.f32 %v659, 0.5
  %v709 = vmul.f32 %v700, 0.5
  %v710 = vmul.f32 %v650, 0.70710677
  %v711 = vmul.f32 %v691, 0.70710677
  %v712 = vmul.f32 %v653, 0.70710677
  %v713 = vmul.f32 %v694, 0.70710677
  %v714 = vmul.f32 %v656, 0.70710677
  %v715 = vmul.f32 %v697, 0.70710677
  %v716 = vmul.f32 %v659, 0.70710677
  %v717 = vmul.f32 %v700, 0.70710677
  %v718 = vmul.f32 %v710, %v710
  %v719 = vmin.f32 16.0, %v718
  %v720 = vmul.f32 %v719, 2.1237322e-06
  %v721 = vadd.f32 %v720, 0.00028619796
  %v722 = vmul.f32 %v719, %v721
  %v723 = vadd.f32 %v722, 0.0036580483
  %v724 = vmul.f32 %v719, %v723
  %v725 = vadd.f32 %v724, 0.05243302
  %v726 = vmul.f32 %v719, %v725
  %v727 = vadd.f32 %v726, 0.18741608
  %v728 = vmul.f32 %v719, %v727
  %v729 = vadd.f32 %v728, 1.1283791
  %v730 = vmul.f32 %v710, %v729
  %v731 = vmul.f32 %v719, 3.8918573e-05
  %v732 = vadd.f32 %v731, 0.001143296
  %v733 = vmul.f32 %v719, %v732
  %v734 = vadd.f32 %v733, 0.014752088
  %v735 = vmul.f32 %v719, %v734
  %v736 = vadd.f32 %v735, 0.112945676
  %v737 = vmul.f32 %v719, %v736
  %v738 = vadd.f32 %v737, 0.4994258
  %v739 = vmul.f32 %v719, %v738
  %v740 = vadd.f32 %v739, 1.0
  %v741 = vrcp.pop %v740
  %v742 = vmul.f32 %v740, %v741
  %v743 = vsub.f32 1.0, %v742
  %v744 = vmul.f32 %v741, %v743
  %v745 = vadd.f32 %v741, %v744
  %vm746 = vweird.f32 %v740
  %vm747 = vweird.f32 %v741
  %vm748 = vmor %vm746, %vm747
  %v749 = vsel %vm748, %v741, %v745
  %v750 = vand.u32 2147483647, %v740
  %vm751 = vcmp.eq.f32.partialorder %v750, 8.507059e+37
  %v752 = vand.u32 %v740, 2147483648
  %v753 = vor.u32 1.1754944e-38, %v752
  %v754 = vsel %vm751, %v753, %v749
  %v755 = vmul.f32 %v730, %v754
  %v756 = vmin.f32 %v755, 1.0
  %v757 = vmax.f32 %v756, -1.0
  %v758 = vmul.f32 %v711, %v711
  %v759 = vmin.f32 16.0, %v758
  %v760 = vmul.f32 %v759, 2.1237322e-06
  %v761 = vadd.f32 %v760, 0.00028619796
  %v762 = vmul.f32 %v759, %v761
  %v763 = vadd.f32 %v762, 0.0036580483
  %v764 = vmul.f32 %v759, %v763
  %v765 = vadd.f32 %v764, 0.05243302
  %v766 = vmul.f32 %v759, %v765
  %v767 = vadd.f32 %v766, 0.18741608
  %v768 = vmul.f32 %v759, %v767
  %v769 = vadd.f32 %v768, 1.1283791
  %v770 = vmul.f32 %v711, %v769
  %v771 = vmul.f32 %v759, 3.8918573e-05
  %v772 = vadd.f32 %v771, 0.001143296
  %v773 = vmul.f32 %v759, %v772
  %v774 = vadd.f32 %v773, 0.014752088
  %v775 = vmul.f32 %v759, %v774
  %v776 = vadd.f32 %v775, 0.112945676
  %v777 = vmul.f32 %v759, %v776
  %v778 = vadd.f32 %v777, 0.4994258
  %v779 = vmul.f32 %v759, %v778
  %v780 = vadd.f32 %v779, 1.0
  %v781 = vrcp.pop %v780
  %v782 = vmul.f32 %v780, %v781
  %v783 = vsub.f32 1.0, %v782
  %v784 = vmul.f32 %v781, %v783
  %v785 = vadd.f32 %v781, %v784
  %vm786 = vweird.f32 %v780
  %vm787 = vweird.f32 %v781
  %vm788 = vmor %vm786, %vm787
  %v789 = vsel %vm788, %v781, %v785
  %v790 = vand.u32 2147483647, %v780
  %vm791 = vcmp.eq.f32.partialorder %v790, 8.507059e+37
  %v792 = vand.u32 %v780, 2147483648
  %v793 = vor.u32 1.1754944e-38, %v792
  %v794 = vsel %vm791, %v793, %v789
  %v795 = vmul.f32 %v770, %v794
  %v796 = vmin.f32 %v795, 1.0
  %v797 = vmax.f32 %v796, -1.0
  %v798 = vmul.f32 %v712, %v712
  %v799 = vmin.f32 16.0, %v798
  %v800 = vmul.f32 %v799, 2.1237322e-06
  %v801 = vadd.f32 %v800, 0.00028619796
  %v802 = vmul.f32 %v799, %v801
  %v803 = vadd.f32 %v802, 0.0036580483
  %v804 = vmul.f32 %v799, %v803
  %v805 = vadd.f32 %v804, 0.05243302
  %v806 = vmul.f32 %v799, %v805
  %v807 = vadd.f32 %v806, 0.18741608
  %v808 = vmul.f32 %v799, %v807
  %v809 = vadd.f32 %v808, 1.1283791
  %v810 = vmul.f32 %v712, %v809
  %v811 = vmul.f32 %v799, 3.8918573e-05
  %v812 = vadd.f32 %v811, 0.001143296
  %v813 = vmul.f32 %v799, %v812
  %v814 = vadd.f32 %v813, 0.014752088
  %v815 = vmul.f32 %v799, %v814
  %v816 = vadd.f32 %v815, 0.112945676
  %v817 = vmul.f32 %v799, %v816
  %v818 = vadd.f32 %v817, 0.4994258
  %v819 = vmul.f32 %v799, %v818
  %v820 = vadd.f32 %v819, 1.0
  %v821 = vrcp.pop %v820
  %v822 = vmul.f32 %v820, %v821
  %v823 = vsub.f32 1.0, %v822
  %v824 = vmul.f32 %v821, %v823
  %v825 = vadd.f32 %v821, %v824
  %vm826 = vweird.f32 %v820
  %vm827 = vweird.f32 %v821
  %vm828 = vmor %vm826, %vm827
  %v829 = vsel %vm828, %v821, %v825
  %v830 = vand.u32 2147483647, %v820
  %vm831 = vcmp.eq.f32.partialorder %v830, 8.507059e+37
  %v832 = vand.u32 %v820, 2147483648
  %v833 = vor.u32 1.1754944e-38, %v832
  %v834 = vsel %vm831, %v833, %v829
  %v835 = vmul.f32 %v810, %v834
  %v836 = vmin.f32 %v835, 1.0
  %v837 = vmax.f32 %v836, -1.0
  %v838 = vmul.f32 %v713, %v713
  %v839 = vmin.f32 16.0, %v838
  %v840 = vmul.f32 %v839, 2.1237322e-06
  %v841 = vadd.f32 %v840, 0.00028619796
  %v842 = vmul.f32 %v839, %v841
  %v843 = vadd.f32 %v842, 0.0036580483
  %v844 = vmul.f32 %v839, %v843
  %v845 = vadd.f32 %v844, 0.05243302
  %v846 = vmul.f32 %v839, %v845
  %v847 = vadd.f32 %v846, 0.18741608
  %v848 = vmul.f32 %v839, %v847
  %v849 = vadd.f32 %v848, 1.1283791
  %v850 = vmul.f32 %v713, %v849
  %v851 = vmul.f32 %v839, 3.8918573e-05
  %v852 = vadd.f32 %v851, 0.001143296
  %v853 = vmul.f32 %v839, %v852
  %v854 = vadd.f32 %v853, 0.014752088
  %v855 = vmul.f32 %v839, %v854
  %v856 = vadd.f32 %v855, 0.112945676
  %v857 = vmul.f32 %v839, %v856
  %v858 = vadd.f32 %v857, 0.4994258
  %v859 = vmul.f32 %v839, %v858
  %v860 = vadd.f32 %v859, 1.0
  %v861 = vrcp.pop %v860
  %v862 = vmul.f32 %v860, %v861
  %v863 = vsub.f32 1.0, %v862
  %v864 = vmul.f32 %v861, %v863
  %v865 = vadd.f32 %v861, %v864
  %vm866 = vweird.f32 %v860
  %vm867 = vweird.f32 %v861
  %vm868 = vmor %vm866, %vm867
  %v869 = vsel %vm868, %v861, %v865
  %v870 = vand.u32 2147483647, %v860
  %vm871 = vcmp.eq.f32.partialorder %v870, 8.507059e+37
  %v872 = vand.u32 %v860, 2147483648
  %v873 = vor.u32 1.1754944e-38, %v872
  %v874 = vsel %vm871, %v873, %v869
  %v875 = vmul.f32 %v850, %v874
  %v876 = vmin.f32 %v875, 1.0
  %v877 = vmax.f32 %v876, -1.0
  %v878 = vmul.f32 %v714, %v714
  %v879 = vmin.f32 16.0, %v878
  %v880 = vmul.f32 %v879, 2.1237322e-06
  %v881 = vadd.f32 %v880, 0.00028619796
  %v882 = vmul.f32 %v879, %v881
  %v883 = vadd.f32 %v882, 0.0036580483
  %v884 = vmul.f32 %v879, %v883
  %v885 = vadd.f32 %v884, 0.05243302
  %v886 = vmul.f32 %v879, %v885
  %v887 = vadd.f32 %v886, 0.18741608
  %v888 = vmul.f32 %v879, %v887
  %v889 = vadd.f32 %v888, 1.1283791
  %v890 = vmul.f32 %v714, %v889
  %v891 = vmul.f32 %v879, 3.8918573e-05
  %v892 = vadd.f32 %v891, 0.001143296
  %v893 = vmul.f32 %v879, %v892
  %v894 = vadd.f32 %v893, 0.014752088
  %v895 = vmul.f32 %v879, %v894
  %v896 = vadd.f32 %v895, 0.112945676
  %v897 = vmul.f32 %v879, %v896
  %v898 = vadd.f32 %v897, 0.4994258
  %v899 = vmul.f32 %v879, %v898
  %v900 = vadd.f32 %v899, 1.0
  %v901 = vrcp.pop %v900
  %v902 = vmul.f32 %v900, %v901
  %v903 = vsub.f32 1.0, %v902
  %v904 = vmul.f32 %v901, %v903
  %v905 = vadd.f32 %v901, %v904
  %vm906 = vweird.f32 %v900
  %vm907 = vweird.f32 %v901
  %vm908 = vmor %vm906, %vm907
  %v909 = vsel %vm908, %v901, %v905
  %v910 = vand.u32 2147483647, %v900
  %vm911 = vcmp.eq.f32.partialorder %v910, 8.507059e+37
  %v912 = vand.u32 %v900, 2147483648
  %v913 = vor.u32 1.1754944e-38, %v912
  %v914 = vsel %vm911, %v913, %v909
  %v915 = vmul.f32 %v890, %v914
  %v916 = vmin.f32 %v915, 1.0
  %v917 = vmax.f32 %v916, -1.0
  %v918 = vmul.f32 %v715, %v715
  %v919 = vmin.f32 16.0, %v918
  %v920 = vmul.f32 %v919, 2.1237322e-06
  %v921 = vadd.f32 %v920, 0.00028619796
  %v922 = vmul.f32 %v919, %v921
  %v923 = vadd.f32 %v922, 0.0036580483
  %v924 = vmul.f32 %v919, %v923
  %v925 = vadd.f32 %v924, 0.05243302
  %v926 = vmul.f32 %v919, %v925
  %v927 = vadd.f32 %v926, 0.18741608
  %v928 = vmul.f32 %v919, %v927
  %v929 = vadd.f32 %v928, 1.1283791
  %v930 = vmul.f32 %v715, %v929
  %v931 = vmul.f32 %v919, 3.8918573e-05
  %v932 = vadd.f32 %v931, 0.001143296
  %v933 = vmul.f32 %v919, %v932
  %v934 = vadd.f32 %v933, 0.014752088
  %v935 = vmul.f32 %v919, %v934
  %v936 = vadd.f32 %v935, 0.112945676
  %v937 = vmul.f32 %v919, %v936
  %v938 = vadd.f32 %v937, 0.4994258
  %v939 = vmul.f32 %v919, %v938
  %v940 = vadd.f32 %v939, 1.0
  %v941 = vrcp.pop %v940
  %v942 = vmul.f32 %v940, %v941
  %v943 = vsub.f32 1.0, %v942
  %v944 = vmul.f32 %v941, %v943
  %v945 = vadd.f32 %v941, %v944
  %vm946 = vweird.f32 %v940
  %vm947 = vweird.f32 %v941
  %vm948 = vmor %vm946, %vm947
  %v949 = vsel %vm948, %v941, %v945
  %v950 = vand.u32 2147483647, %v940
  %vm951 = vcmp.eq.f32.partialorder %v950, 8.507059e+37
  %v952 = vand.u32 %v940, 2147483648
  %v953 = vor.u32 1.1754944e-38, %v952
  %v954 = vsel %vm951, %v953, %v949
  %v955 = vmul.f32 %v930, %v954
  %v956 = vmin.f32 %v955, 1.0
  %v957 = vmax.f32 %v956, -1.0
  %v958 = vmul.f32 %v716, %v716
  %v959 = vmin.f32 16.0, %v958
  %v960 = vmul.f32 %v959, 2.1237322e-06
  %v961 = vadd.f32 %v960, 0.00028619796
  %v962 = vmul.f32 %v959, %v961
  %v963 = vadd.f32 %v962, 0.0036580483
  %v964 = vmul.f32 %v959, %v963
  %v965 = vadd.f32 %v964, 0.05243302
  %v966 = vmul.f32 %v959, %v965
  %v967 = vadd.f32 %v966, 0.18741608
  %v968 = vmul.f32 %v959, %v967
  %v969 = vadd.f32 %v968, 1.1283791
  %v970 = vmul.f32 %v716, %v969
  %v971 = vmul.f32 %v959, 3.8918573e-05
  %v972 = vadd.f32 %v971, 0.001143296
  %v973 = vmul.f32 %v959, %v972
  %v974 = vadd.f32 %v973, 0.014752088
  %v975 = vmul.f32 %v959, %v974
  %v976 = vadd.f32 %v975, 0.112945676
  %v977 = vmul.f32 %v959, %v976
  %v978 = vadd.f32 %v977, 0.4994258
  %v979 = vmul.f32 %v959, %v978
  %v980 = vadd.f32 %v979, 1.0
  %v981 = vrcp.pop %v980
  %v982 = vmul.f32 %v980, %v981
  %v983 = vsub.f32 1.0, %v982
  %v984 = vmul.f32 %v981, %v983
  %v985 = vadd.f32 %v981, %v984
  %vm986 = vweird.f32 %v980
  %vm987 = vweird.f32 %v981
  %vm988 = vmor %vm986, %vm987
  %v989 = vsel %vm988, %v981, %v985
  %v990 = vand.u32 2147483647, %v980
  %vm991 = vcmp.eq.f32.partialorder %v990, 8.507059e+37
  %v992 = vand.u32 %v980, 2147483648
  %v993 = vor.u32 1.1754944e-38, %v992
  %v994 = vsel %vm991, %v993, %v989
  %v995 = vmul.f32 %v970, %v994
  %v996 = vmin.f32 %v995, 1.0
  %v997 = vmax.f32 %v996, -1.0
  %v998 = vmul.f32 %v717, %v717
  %v999 = vmin.f32 16.0, %v998
  %v1000 = vmul.f32 %v999, 2.1237322e-06
  %v1001 = vadd.f32 %v1000, 0.00028619796
  %v1002 = vmul.f32 %v999, %v1001
  %v1003 = vadd.f32 %v1002, 0.0036580483
  %v1004 = vmul.f32 %v999, %v1003
  %v1005 = vadd.f32 %v1004, 0.05243302
  %v1006 = vmul.f32 %v999, %v1005
  %v1007 = vadd.f32 %v1006, 0.18741608
  %v1008 = vmul.f32 %v999, %v1007
  %v1009 = vadd.f32 %v1008, 1.1283791
  %v1010 = vmul.f32 %v717, %v1009
  %v1011 = vmul.f32 %v999, 3.8918573e-05
  %v1012 = vadd.f32 %v1011, 0.001143296
  %v1013 = vmul.f32 %v999, %v1012
  %v1014 = vadd.f32 %v1013, 0.014752088
  %v1015 = vmul.f32 %v999, %v1014
  %v1016 = vadd.f32 %v1015, 0.112945676
  %v1017 = vmul.f32 %v999, %v1016
  %v1018 = vadd.f32 %v1017, 0.4994258
  %v1019 = vmul.f32 %v999, %v1018
  %v1020 = vadd.f32 %v1019, 1.0
  %v1021 = vrcp.pop %v1020
  %v1022 = vmul.f32 %v1020, %v1021
  %v1023 = vsub.f32 1.0, %v1022
  %v1024 = vmul.f32 %v1021, %v1023
  %v1025 = vadd.f32 %v1021, %v1024
  %vm1026 = vweird.f32 %v1020
  %vm1027 = vweird.f32 %v1021
  %vm1028 = vmor %vm1026, %vm1027
  %v1029 = vsel %vm1028, %v1021, %v1025
  %v1030 = vand.u32 2147483647, %v1020
  %vm1031 = vcmp.eq.f32.partialorder %v1030, 8.507059e+37
  %v1032 = vand.u32 %v1020, 2147483648
  %v1033 = vor.u32 1.1754944e-38, %v1032
  %v1034 = vsel %vm1031, %v1033, %v1029
  %v1035 = vmul.f32 %v1010, %v1034
  %v1036 = vmin.f32 %v1035, 1.0
  %v1037 = vmax.f32 %v1036, -1.0
  %v1038 = vadd.f32 %v757, 1.0
  %v1039 = vadd.f32 %v797, 1.0
  %v1040 = vadd.f32 %v837, 1.0
  %v1041 = vadd.f32 %v877, 1.0
  %v1042 = vadd.f32 %v917, 1.0
  %v1043 = vadd.f32 %v957, 1.0
  %v1044 = vadd.f32 %v997, 1.0
  %v1045 = vadd.f32 %v1037, 1.0
  %v1046 = vmul.f32 %v702, %v1038
  %v1047 = vmul.f32 %v703, %v1039
  %v1048 = vmul.f32 %v704, %v1040
  %v1049 = vmul.f32 %v705, %v1041
  %v1050 = vmul.f32 %v706, %v1042
  %v1051 = vmul.f32 %v707, %v1043
  %v1052 = vmul.f32 %v708, %v1044
  %v1053 = vmul.f32 %v709, %v1045
  %v1054 = vmul.f32 %v638, %v1046
  %v1055 = vmul.f32 %v679, %v1047
  %v1056 = vmul.f32 %v641, %v1048
  %v1057 = vmul.f32 %v682, %v1049
  %v1058 = vmul.f32 %v644, %v1050
  %v1059 = vmul.f32 %v685, %v1051
  %v1060 = vmul.f32 %v647, %v1052
  %v1061 = vmul.f32 %v688, %v1053
  %1062 = vmatpush.msra.mxu0 0.0
  %1063 = vmatpush.msra.mxu0 0.0
  %1064 = vmatpush.msra.mxu0 0.0
  %1065 = vmatpush.msra.mxu0 0.0
  %1066 = vmatpush.msra.mxu0 0.0
  %1067 = vmatpush.msra.mxu0 0.0
  %1068 = vmatpush.msra.mxu0 0.0
  %1069 = vmatpush.msra.mxu0 0.0
  %1070 = vmatpush.msra.mxu0 0.0
  %1071 = vmatpush.msra.mxu0 0.0
  %1072 = vmatpush.msra.mxu0 0.0
  %1073 = vmatpush.msra.mxu0 0.0
  %1074 = vmatpush.msra.mxu0 %v1060
  %1075 = vmatpush.msra.mxu0 %v1058
  %1076 = vmatpush.msra.mxu0 %v1056
  %1077 = vmatpush.msra.mxu0 %v1054
  %1078 = vmatmul.f32.gmra.mxu0 %v562
  %v1079 = vpop.f32.mrf.mxu0
  %v1080 = vadd.f32 %v558, %v1079
  %1081 = vdwg.mxu0
  %1082 = vmatpush.msra.mxu0 0.0
  %1083 = vmatpush.msra.mxu0 0.0
  %1084 = vmatpush.msra.mxu0 0.0
  %1085 = vmatpush.msra.mxu0 0.0
  %1086 = vmatpush.msra.mxu0 0.0
  %1087 = vmatpush.msra.mxu0 0.0
  %1088 = vmatpush.msra.mxu0 0.0
  %1089 = vmatpush.msra.mxu0 0.0
  %1090 = vmatpush.msra.mxu0 0.0
  %1091 = vmatpush.msra.mxu0 0.0
  %1092 = vmatpush.msra.mxu0 0.0
  %1093 = vmatpush.msra.mxu0 0.0
  %1094 = vmatpush.msra.mxu0 %v1061
  %1095 = vmatpush.msra.mxu0 %v1059
  %1096 = vmatpush.msra.mxu0 %v1057
  %1097 = vmatpush.msra.mxu0 %v1055
  %1098 = vmatmul.f32.gmra.mxu0 %v562
  %v1099 = vpop.f32.mrf.mxu0
  %v1100 = vadd.f32 %v558, %v1099
  %1101 = vdwg.mxu0
  %v1104 = vrot.slane %v1100, 4
  %v1105 = vsel %vm108, %v1080, %v1104
  %s1107 = scalar_lea.vmem %s5, 8
  %1108 = vst [vmem:[%s1107] sm:$0xff] %v1105
  // Predicated region
  $region22: #{gmlp_forward_nchw.1} parent=0 // pred_check
    _
  $region23: #{gmlp_forward_nchw.1} parent=0 // pred_check_branch
    %1110 = sbr.rel (0) target = $region25
  $region24: #{gmlp_forward_nchw.1} parent=0 // pred_region
    _
  $region25: #{gmlp_forward_nchw.1} parent=0 // pred_fallthru
    _
  // Predicated region
  $region26: #{gmlp_forward_nchw.1} parent=0 // pred_check
    _
  $region27: #{gmlp_forward_nchw.1} parent=0 // pred_check_branch
    %1112 = sbr.rel (0) target = $region29
  $region28: #{gmlp_forward_nchw.1} parent=0 // pred_region
    _
  $region29: #{gmlp_forward_nchw.1} parent=0 // pred_fallthru
    _

</llo_original>
